<compile_context>
chip_gen: v7x
topology: tpu7x:2x2x1
jax: 0.10.0
libtpu: 0.0.40
codegen_flags: <defaults>
</compile_context>

<pallas_src>
import jax
import jax.numpy as jnp
from jax.experimental import pallas as pl
from jax.experimental.pallas import tpu as pltpu


_VMEM_BUDGET = 40 * 1024 * 1024   # tile footprint budget (double-buffered)
_VMEM_LIMIT = 48 * 1024 * 1024    # scoped VMEM limit; v7x physical is 64 MiB


def _round_up(x, m):
    return ((x + m - 1) // m) * m


def _sublane(dtype):
    # Minimum second-minor alignment per dtype (sub-32-bit packs on sublanes).
    return {4: 8, 2: 16, 1: 32}[jnp.dtype(dtype).itemsize]


def _shrink(v, align):
    return max(align, (v // 2) // align * align)


def _footprint(tm, tn, tk, cbytes, obytes, with_acc):
    f = (2 * tm * tk * cbytes      # x tiles (double-buffered)
         + 2 * tk * tn * cbytes    # w tiles (double-buffered)
         + 2 * tm * tn * obytes    # out tiles
         + 2 * tn * 4)             # bias row (f32)
    if with_acc:
        f += tm * tn * 4           # f32 accumulator scratch
    return f


# --------------------------------------------------------------------------
# Kernels
# --------------------------------------------------------------------------
def _fused_k_kernel(x_ref, w_ref, b_ref, o_ref):
    """Whole-K contraction in one grid step; bias fused in the f32 epilogue."""
    acc = jnp.dot(x_ref[...], w_ref[...], preferred_element_type=jnp.float32)
    o_ref[...] = (acc + b_ref[...].astype(jnp.float32)).astype(o_ref.dtype)


def _split_k_kernel(x_ref, w_ref, b_ref, o_ref, acc_ref):
    """K-tiled reduction: f32 VMEM accumulator, init at k==0, epilogue at last."""
    k = pl.program_id(2)

    @pl.when(k == 0)
    def _():
        acc_ref[...] = jnp.zeros_like(acc_ref)

    acc_ref[...] += jnp.dot(
        x_ref[...], w_ref[...], preferred_element_type=jnp.float32
    )

    @pl.when(k == pl.num_programs(2) - 1)
    def _():
        o_ref[...] = (acc_ref[...] + b_ref[...].astype(jnp.float32)).astype(
            o_ref.dtype
        )


# --------------------------------------------------------------------------
# Tiling plan
# --------------------------------------------------------------------------
def _plan_tiles(M, K, N, compute_dtype, out_dtype, tm, tn, tk, fused_k_max):
    cb = jnp.dtype(compute_dtype).itemsize
    ob = jnp.dtype(out_dtype).itemsize
    sub = max(_sublane(compute_dtype), _sublane(out_dtype))

    tm = max(sub, min(_round_up(tm, sub), _round_up(M, sub)))
    tn = max(128, min(_round_up(tn, 128), _round_up(N, 128)))

    # ---- fused-K: whole reduction in one grid step (no acc RMW, no K axis).
    if K <= fused_k_max:
        tm_f, tn_f = tm, tn
        while _footprint(tm_f, tn_f, K, cb, ob, False) > _VMEM_BUDGET:
            if tn_f > 256:
                tn_f = _shrink(tn_f, 128)
            elif tm_f > 2 * sub:
                tm_f = _shrink(tm_f, sub)
            else:
                break
        if _footprint(tm_f, tn_f, K, cb, ob, False) <= _VMEM_BUDGET:
            return dict(fused=True, tm=tm_f, tn=tn_f, tk=K, k_pad=K, sub=sub)

    # ---- split-K: shrink (tk, tn, tm) until the double-buffered tiles fit.
    tk = max(128, min(_round_up(tk, 128), _round_up(K, 128)))
    while _footprint(tm, tn, tk, cb, ob, True) > _VMEM_BUDGET:
        if tk > 512:
            tk = _shrink(tk, 128)
        elif tn > 256:
            tn = _shrink(tn, 128)
        elif tm > 2 * sub:
            tm = _shrink(tm, sub)
        else:
            break

    # Prefer a tk that divides round_up(K, 128) (no K padding pass); only pad
    # K up to a multiple of tk when no reasonable divisor exists.
    k128 = _round_up(K, 128)
    if k128 <= tk:
        tk_div, k_pad = k128, k128
    else:
        tk_div = 128
        for cand in range(tk, 127, -128):
            if k128 % cand == 0:
                tk_div = cand
                break
        if tk_div >= min(512, tk):
            k_pad = k128
        else:
            tk_div = tk
            k_pad = _round_up(K, tk)
    return dict(fused=False, tm=tm, tn=tn, tk=tk_div, k_pad=k_pad, sub=sub)


# --------------------------------------------------------------------------
# pallas_call wrapper
# --------------------------------------------------------------------------
def _pallas_linear(x2d, w2d, b2d, out_dtype, tm, tn, tk, fused_k_max):
    M, K = x2d.shape
    N = w2d.shape[1]
    plan = _plan_tiles(M, K, N, x2d.dtype, out_dtype, tm, tn, tk, fused_k_max)
    tm, tn, tk = plan["tm"], plan["tn"], plan["tk"]
    K_pad = plan["k_pad"]

    M_pad = _round_up(M, tm)
    N_pad = _round_up(N, tn)

    # Pad only when needed; already-aligned shapes see no extra HBM pass, and
    # any pad of the cast operands fuses with the bf16 cast in XLA.
    if (M_pad, K_pad) != (M, K):
        x2d = jnp.pad(x2d, ((0, M_pad - M), (0, K_pad - K)))
    if (K_pad, N_pad) != (K, N):
        w2d = jnp.pad(w2d, ((0, K_pad - K), (0, N_pad - N)))
    if N_pad != N:
        b2d = jnp.pad(b2d, ((0, 0), (0, N_pad - N)))

    mt, nt = M_pad // tm, N_pad // tn
    cb = x2d.dtype.itemsize
    ob = jnp.dtype(out_dtype).itemsize

    if plan["fused"]:
        # Keep the more expensive-to-restream operand VMEM-resident across the
        # inner grid sweep (Pallas skips the DMA when the block index repeats).
        x_bytes = M_pad * K_pad * cb
        w_bytes = K_pad * N_pad * cb
        swap = (w_bytes + x_bytes * nt) < (x_bytes + w_bytes * mt)
        if swap:   # W resident per column sweep; x re-streamed nt times.
            grid = (nt, mt)
            x_map = lambda j, i: (i, 0)
            w_map = lambda j, i: (0, j)
            b_map = lambda j, i: (0, j)
            o_map = lambda j, i: (i, j)
            stream_bytes = w_bytes + x_bytes * nt
        else:      # x resident per row sweep; W re-streamed mt times.
            grid = (mt, nt)
            x_map = lambda i, j: (i, 0)
            w_map = lambda i, j: (0, j)
            b_map = lambda i, j: (0, j)
            o_map = lambda i, j: (i, j)
            stream_bytes = x_bytes + w_bytes * mt

        cost = pl.CostEstimate(
            flops=2 * M_pad * N_pad * K_pad,
            transcendentals=0,
            bytes_accessed=stream_bytes + N_pad * 4 + M_pad * N_pad * ob,
        )
        out2d = pl.pallas_call(
            _fused_k_kernel,
            out_shape=jax.ShapeDtypeStruct((M_pad, N_pad), out_dtype),
            grid_spec=pltpu.PrefetchScalarGridSpec(
                num_scalar_prefetch=0,
                grid=grid,
                in_specs=[
                    pl.BlockSpec((tm, K_pad), x_map),
                    pl.BlockSpec((K_pad, tn), w_map),
                    pl.BlockSpec((1, tn), b_map),
                ],
                out_specs=pl.BlockSpec((tm, tn), o_map),
            ),
            compiler_params=pltpu.CompilerParams(
                dimension_semantics=("parallel", "parallel"),
                vmem_limit_bytes=_VMEM_LIMIT,
            ),
            cost_estimate=cost,
        )(x2d, w2d, b2d)
    else:
        kt = K_pad // tk
        cost = pl.CostEstimate(
            flops=2 * M_pad * N_pad * K_pad,
            transcendentals=0,
            bytes_accessed=(
                M_pad * K_pad * cb * nt       # x re-streamed once per N tile
                + K_pad * N_pad * cb * mt     # w re-streamed once per M tile
                + N_pad * 4 * mt              # bias
                + M_pad * N_pad * ob          # output written once
            ),
        )
        out2d = pl.pallas_call(
            _split_k_kernel,
            out_shape=jax.ShapeDtypeStruct((M_pad, N_pad), out_dtype),
            grid_spec=pltpu.PrefetchScalarGridSpec(
                num_scalar_prefetch=0,
                grid=(mt, nt, kt),
                in_specs=[
                    pl.BlockSpec((tm, tk), lambda i, j, k: (i, k)),
                    pl.BlockSpec((tk, tn), lambda i, j, k: (k, j)),
                    pl.BlockSpec((1, tn), lambda i, j, k: (0, j)),
                ],
                out_specs=pl.BlockSpec((tm, tn), lambda i, j, k: (i, j)),
                scratch_shapes=[pltpu.VMEM((tm, tn), jnp.float32)],
            ),
            compiler_params=pltpu.CompilerParams(
                dimension_semantics=("parallel", "parallel", "arbitrary"),
                vmem_limit_bytes=_VMEM_LIMIT,
            ),
            cost_estimate=cost,
        )(x2d, w2d, b2d)

    return out2d[:M, :N]


# --------------------------------------------------------------------------
# Public forward
# --------------------------------------------------------------------------
def output_module_forward(
    x,
    weight,
    bias,
    *,
    compute_dtype=jnp.bfloat16,   # MXU-native inputs; f32 accumulation
    use_pallas=None,              # None -> auto-dispatch on problem size
    tm=512,
    tn=1024,
    tk=None,                      # None -> 1024 (4-byte) / 2048 (2-byte)
    fused_k_max=4096,             # K at/below this: whole-K in one grid step
):
    """Linear output head: x (B, S, E) -> (B, S, O)."""
    B, S, E = x.shape
    O = weight.shape[1]
    M = B * S
    out_dtype = x.dtype

    compute_dtype = jnp.dtype(
        compute_dtype if compute_dtype is not None else x.dtype
    )
    if tk is None:
        tk = 1024 if compute_dtype.itemsize >= 4 else 2048

    xc = x.astype(compute_dtype)
    wc = weight.astype(compute_dtype)

    if use_pallas is None:
        # Tiny problems: pallas_call fixed cost dominates; let XLA fuse it.
        use_pallas = (2 * M * E * O) >= (1 << 24)

    if not use_pallas:
        # Same numerics as the kernel path: compute_dtype inputs, f32 accumulate.
        acc = jnp.dot(xc.reshape(M, E), wc, preferred_element_type=jnp.float32)
        out2d = (acc + bias.astype(jnp.float32)).astype(out_dtype)
        return out2d.reshape(B, S, O)

    out2d = _pallas_linear(
        xc.reshape(M, E),
        wc,
        bias.reshape(1, O).astype(jnp.float32),
        out_dtype,
        tm,
        tn,
        tk,
        fused_k_max,
    )
    return out2d.reshape(B, S, O)


def reference_forward(x, weight, bias):
    return (
        jnp.einsum("bse,eo->bso", x, weight, preferred_element_type=jnp.float32)
        + bias
    ).astype(x.dtype)


if __name__ == "__main__":
    key = jax.random.PRNGKey(0)
    kx, kw, kb, kx2, kw2, kb2 = jax.random.split(key, 6)

    # ---- Test 1: small shapes, fused-K path, f32 compute (tight tolerance).
    batch, seq, embedding_size, output_size = 2, 8, 32, 16
    x = jax.random.normal(kx, (batch, seq, embedding_size), dtype=jnp.float32)
    weight = jax.random.normal(
        kw, (embedding_size, output_size), dtype=jnp.float32
    ) * (1.0 / jnp.sqrt(embedding_size))
    bias = jax.random.normal(kb, (output_size,), dtype=jnp.float32) * 0.01

    out = output_module_forward(
        x, weight, bias, use_pallas=True, compute_dtype=jnp.float32
    )
    jax.block_until_ready(out)
    ref = reference_forward(x, weight, bias)
    assert out.shape == (batch, seq, output_size)
    assert jnp.allclose(out, ref, atol=1e-5, rtol=1e-5)

    # ---- Test 2: split-K path (multi-K grid, N tiling, padding, accumulator).
    B2, S2, E2, O2 = 2, 20, 384, 200
    x2 = jax.random.normal(kx2, (B2, S2, E2), dtype=jnp.float32)
    w2 = jax.random.normal(kw2, (E2, O2), dtype=jnp.float32) * (
        1.0 / jnp.sqrt(E2)
    )
    b2 = jax.random.normal(kb2, (O2,), dtype=jnp.float32) * 0.01

    out2 = output_module_forward(
        x2, w2, b2, use_pallas=True, compute_dtype=jnp.float32,
        tm=128, tn=128, tk=128, fused_k_max=0,
    )
    jax.block_until_ready(out2)
    ref2 = reference_forward(x2, w2, b2)
    assert out2.shape == (B2, S2, O2)
    assert jnp.allclose(out2, ref2, atol=1e-4, rtol=1e-4)

    # ---- Test 3: default path (bf16 MXU inputs, fused-K, f32 accumulation).
    out2_bf16 = output_module_forward(x2, w2, b2, use_pallas=True)
    jax.block_until_ready(out2_bf16)
    assert out2_bf16.shape == (B2, S2, O2)
    assert jnp.allclose(out2_bf16, ref2, atol=5e-2, rtol=5e-2)

    # ---- Test 4: tiny-shape auto-dispatch takes the plain-XLA path.
    out_auto = output_module_forward(x, weight, bias, compute_dtype=jnp.float32)
    jax.block_until_ready(out_auto)
    assert jnp.allclose(out_auto, ref, atol=1e-5, rtol=1e-5)

    print("KERNEL_OK")
</pallas_src>

<mosaic_0001>
module attributes {stable_mosaic.version = 11 : i64} {
  func.func @_fused_k_kernel(%arg0: i32, %arg1: i32, %arg2: memref<16x32xf32, #tpu.memory_space<vmem>>, %arg3: memref<32x128xf32, #tpu.memory_space<vmem>>, %arg4: memref<1x128xf32, #tpu.memory_space<vmem>>, %arg5: memref<16x128xf32, #tpu.memory_space<vmem>>) attributes {dimension_semantics = [#tpu.dimension_semantics<parallel>, #tpu.dimension_semantics<parallel>], iteration_bounds = array<i64: 1, 1>, scalar_prefetch = 0 : i64, scratch_operands = 0 : i64, tpu.core_type = #tpu.core_type<tc>, window_params = [{transform_indices = @transform_0, window_bounds = array<i64: 16, 32>}, {transform_indices = @transform_1, window_bounds = array<i64: 32, 128>}, {transform_indices = @transform_2, window_bounds = array<i64: 1, 128>}, {transform_indices = @transform_3, window_bounds = array<i64: 16, 128>}]} {
    %c0 = arith.constant 0 : index
    %c0_0 = arith.constant 0 : index
    %0 = vector.load %arg2[%c0, %c0_0] : memref<16x32xf32, #tpu.memory_space<vmem>>, vector<16x32xf32>
    %c0_1 = arith.constant 0 : index
    %c0_2 = arith.constant 0 : index
    %1 = vector.load %arg3[%c0_1, %c0_2] : memref<32x128xf32, #tpu.memory_space<vmem>>, vector<32x128xf32>
    %cst = arith.constant dense<0.000000e+00> : vector<16x128xf32>
    %2 = tpu.matmul %0, %1, %cst {dimension_numbers = #tpu.dot_dimension_numbers<[1], [0], [0], [1], [0, 0, 1, 1], [], []>} : vector<16x32xf32>, vector<32x128xf32>, vector<16x128xf32> -> vector<16x128xf32>
    %c0_3 = arith.constant 0 : index
    %c0_4 = arith.constant 0 : index
    %3 = vector.load %arg4[%c0_3, %c0_4] : memref<1x128xf32, #tpu.memory_space<vmem>>, vector<1x128xf32>
    %4 = vector.broadcast %3 : vector<1x128xf32> to vector<16x128xf32>
    %5 = arith.addf %2, %4 : vector<16x128xf32>
    %c0_5 = arith.constant 0 : index
    %c0_6 = arith.constant 0 : index
    %6 = vector.load %arg5[%c0_5, %c0_6] : memref<16x128xf32, #tpu.memory_space<vmem>>, vector<16x128xf32>
    tpu.vector_store %arg5[%c0_5, %c0_6], %5 {strides = array<i32>} : memref<16x128xf32, #tpu.memory_space<vmem>>, vector<16x128xf32>,
    return
  }
  func.func @transform_0(%arg0: i32, %arg1: i32) -> (i32, i32) {
    %c0_i32 = arith.constant 0 : i32
    %c0_i32_0 = arith.constant 0 : i32
    return %arg0, %c0_i32 : i32, i32
  }
  func.func @transform_1(%arg0: i32, %arg1: i32) -> (i32, i32) {
    %c0_i32 = arith.constant 0 : i32
    %c0_i32_0 = arith.constant 0 : i32
    return %c0_i32, %arg1 : i32, i32
  }
  func.func @transform_2(%arg0: i32, %arg1: i32) -> (i32, i32) {
    %c0_i32 = arith.constant 0 : i32
    %c0_i32_0 = arith.constant 0 : i32
    return %c0_i32, %arg1 : i32, i32
  }
  func.func @transform_3(%arg0: i32, %arg1: i32) -> (i32, i32) {
    %c0_i32 = arith.constant 0 : i32
    return %arg0, %arg1 : i32, i32
  }
}

</mosaic_0001>

<llo_original>
// kernel: tpu_custom_call.1
$region0: #{tpu_custom_call.1}
  #allocation0 [shape = 'u32[]', space=smem, size = 0x4, offset = 0x4, fixed_abs, tag = 'smem constant byte address 0x4 - core index']
  #allocation1 [shape = 'u32[144,128]{1,0:T(1,128)}', space=vmem, size = 0x12000, scoped, tag = 'internal scratch']
  %s0 = inlined_call_operand.hbm [shape: f32[16,32], index: 0, kind: input, shape index: {}]
  %s1 = inlined_call_operand.hbm [shape: f32[32,128], index: 1, kind: input, shape index: {}]
  %s2 = inlined_call_operand.vmem [shape: f32[1,128], index: 2, kind: input, shape index: {}]
  %s3 = inlined_call_operand.hbm [shape: f32[16,128], index: 3, kind: output, shape index: {}]
  %s4 = sld [smem:[#allocation0]]
  $region30: #{tpu_custom_call.1} parent=0
    _
  %s6 = ssub.s32 1, %s4
  %s7 = scalar_select 0, %s6, %s4
  $region1: #{tpu_custom_call.1} parent=0
    #allocation2 [shape = 'u8[8192]{0}', space=vmem, size = 0x2000, scoped, tag = 'input window, operand 0, single buffered']
    #allocation3 [shape = 's32[1]{0}', space=sflag, size = 0x4, scoped, tag = 'scoped memory for tpu_custom_call.1']
    #allocation4 [shape = 's32[1]{0}', space=sflag, size = 0x4, scoped, tag = 'scoped memory for tpu_custom_call.1']
    #allocation5 [shape = 'u8[16384]{0}', space=vmem, size = 0x4000, scoped, tag = 'input window, operand 1, single buffered']
    #allocation6 [shape = 's32[1]{0}', space=sflag, size = 0x4, scoped, tag = 'scoped memory for tpu_custom_call.1']
    #allocation7 [shape = 'u8[8192]{0}', space=vmem, size = 0x2000, scoped, tag = 'output window, operand 0, single buffered']
    %8 = vsyncpa [#allocation3], 0
    %9 = vsyncpa [#allocation6], 0
    %10 = vsyncpa [#allocation4], 0
    // Predicated region
    $region2: #{tpu_custom_call.1} parent=1 // pred_check
      _
    $region3: #{tpu_custom_call.1} parent=1 // pred_check_branch
      %12 = sbr.rel (0) target = $region5
    $region4: #{tpu_custom_call.1} parent=1 // pred_region
      %s14 = ssub.s32 256, 256
      %15 = vsyncadd [#allocation3], %s14
      %s16 = sshll.u32 [#allocation2], 4
      %s17 = int_to_ptr.vmem [resolvable:$true] %s16
      %22 = dma.hbm_to_vmem [thread:$0]  %s0, 256, %s17, [#allocation3], 128, 128, 8
    $region5: #{tpu_custom_call.1} parent=1 // pred_fallthru
      _
    // Predicated region
    $region6: #{tpu_custom_call.1} parent=1 // pred_check
      _
    $region7: #{tpu_custom_call.1} parent=1 // pred_check_branch
      %24 = sbr.rel (0) target = $region9
    $region8: #{tpu_custom_call.1} parent=1 // pred_region
      %s26 = ssub.s32 512, 512
      %27 = vsyncadd [#allocation6], %s26
      %s28 = sshll.u32 [#allocation5], 4
      %s29 = int_to_ptr.vmem [resolvable:$true] %s28
      %34 = dma.hbm_to_vmem [thread:$0]  %s1, 512, %s29, [#allocation6], 128, 128, 8
    $region9: #{tpu_custom_call.1} parent=1 // pred_fallthru
      _
    // Predicated region
    $region10: #{tpu_custom_call.1} parent=1 // pred_check
      _
    $region11: #{tpu_custom_call.1} parent=1 // pred_check_branch
      %36 = sbr.rel (0) target = $region13
    $region12: #{tpu_custom_call.1} parent=1 // pred_region
      _
    $region13: #{tpu_custom_call.1} parent=1 // pred_fallthru
      _
    // Predicated region
    $region14: #{tpu_custom_call.1} parent=1 // pred_check
      _
    $region15: #{tpu_custom_call.1} parent=1 // pred_check_branch
      %38 = sbr.rel (0) target = $region17
    $region16: #{tpu_custom_call.1} parent=1 // pred_region
      %39 = dma.done [#allocation3], 256
    $region17: #{tpu_custom_call.1} parent=1 // pred_fallthru
      _
    // Predicated region
    $region18: #{tpu_custom_call.1} parent=1 // pred_check
      _
    $region19: #{tpu_custom_call.1} parent=1 // pred_check_branch
      %41 = sbr.rel (0) target = $region21
    $region20: #{tpu_custom_call.1} parent=1 // pred_region
      %42 = dma.done [#allocation6], 512
    $region21: #{tpu_custom_call.1} parent=1 // pred_fallthru
      _
    %v43 = vld [vmem:[#allocation2] sm:$0xff]
    %v44 = vld [vmem:[#allocation2 + $0x8] sm:$0xff]
    %v45 = vld [vmem:[#allocation5] sm:$0xff]
    %v46 = vld [vmem:[#allocation5 + $0x8] sm:$0xff]
    %v47 = vld [vmem:[#allocation5 + $0x10] sm:$0xff]
    %v48 = vld [vmem:[#allocation5 + $0x18] sm:$0xff]
    %v49 = vld [vmem:[%s2] sm:$0x1]
    %v51 = vlaneseq
    %v52 = vshrl.u32 %v51, 7
    %v53 = vsub.s32 0, %v52
    %v54 = vrot.slane %v49, %v53
    %vm56 = vcmask 261120
    %v58 = vsel %vm56, %v43, 0
    %v61 = vsel %vm56, %v44, 0
    %63 = vmatprep.subr.mxu0 0.0
    %64 = vmatpush1.msra.mxu0 %v45
    %65 = vmatprep.subr.mxu0 0.0
    %66 = vmatpush1.msra.mxu0 %v46
    %67 = vmatprep.subr.mxu0 0.0
    %68 = vmatpush1.msra.mxu0 %v47
    %69 = vmatprep.subr.mxu0 0.0
    %70 = vmatpush1.msra.mxu0 %v48
    %71 = vmatprep.subr.mxu0 0.0
    %72 = vmatpush1.msra.mxu0 0.0
    %73 = vmatprep.subr.mxu0 0.0
    %74 = vmatpush1.msra.mxu0 0.0
    %75 = vmatprep.subr.mxu0 0.0
    %76 = vmatpush1.msra.mxu0 0.0
    %77 = vmatprep.subr.mxu0 0.0
    %78 = vmatpush1.msra.mxu0 0.0
    %79 = vmatprep.subr.mxu0 0.0
    %80 = vmatpush1.msra.mxu0 0.0
    %81 = vmatprep.subr.mxu0 0.0
    %82 = vmatpush1.msra.mxu0 0.0
    %83 = vmatprep.subr.mxu0 0.0
    %84 = vmatpush1.msra.mxu0 0.0
    %85 = vmatprep.subr.mxu0 0.0
    %86 = vmatpush1.msra.mxu0 0.0
    %87 = vmatprep.subr.mxu0 0.0
    %88 = vmatpush1.msra.mxu0 0.0
    %89 = vmatprep.subr.mxu0 0.0
    %90 = vmatpush1.msra.mxu0 0.0
    %91 = vmatprep.subr.mxu0 0.0
    %92 = vmatpush1.msra.mxu0 0.0
    %93 = vmatprep.subr.mxu0 0.0
    %94 = vmatpush1.msra.mxu0 0.0
    %95 = vmatprep.subr.mxu0 0.0
    %96 = vmatpush1.msra.mxu0 0.0
    %97 = vmatprep.subr.mxu0 0.0
    %98 = vmatpush1.msra.mxu0 0.0
    %99 = vmatprep.subr.mxu0 0.0
    %100 = vmatpush1.msra.mxu0 0.0
    %101 = vmatprep.subr.mxu0 0.0
    %102 = vmatpush1.msra.mxu0 0.0
    %103 = vmatprep.subr.mxu0 0.0
    %104 = vmatpush1.msra.mxu0 0.0
    %105 = vmatprep.subr.mxu0 0.0
    %106 = vmatpush1.msra.mxu0 0.0
    %107 = vmatprep.subr.mxu0 0.0
    %108 = vmatpush1.msra.mxu0 0.0
    %109 = vmatprep.subr.mxu0 0.0
    %110 = vmatpush1.msra.mxu0 0.0
    %111 = vmatprep.subr.mxu0 0.0
    %112 = vmatpush1.msra.mxu0 0.0
    %113 = vmatprep.subr.mxu0 0.0
    %114 = vmatpush1.msra.mxu0 0.0
    %115 = vmatprep.subr.mxu0 0.0
    %116 = vmatpush1.msra.mxu0 0.0
    %117 = vmatprep.subr.mxu0 0.0
    %118 = vmatpush1.msra.mxu0 0.0
    %119 = vmatprep.subr.mxu0 0.0
    %120 = vmatpush1.msra.mxu0 0.0
    %121 = vmatprep.subr.mxu0 0.0
    %122 = vmatpush1.msra.mxu0 0.0
    %123 = vmatprep.subr.mxu0 0.0
    %124 = vmatpush1.msra.mxu0 0.0
    %125 = vmatprep.subr.mxu0 0.0
    %126 = vmatpush1.msra.mxu0 0.0
    %127 = vmatprep.mubr.f32.mxu0 0.0
    %128 = vmatmul.mubr.f32.gmra.mrb[0].mxu0 %v58
    %v129 = vpop.f32.mrb[0].mxu0
    %v130 = vadd.f32 %v54, %v129
    %v131 = vpop.f32.mrb[0].mxu0
    %132 = vmatprep.mubr.f32.mxu0 0.0
    %133 = vmatmul.mubr.f32.gmra.mrb[0].mxu0 %v61
    %v134 = vpop.f32.mrb[0].mxu0
    %v135 = vadd.f32 %v54, %v134
    %v136 = vpop.f32.mrb[0].mxu0
    %137 = vdwg.mxu0
    %138 = vst [vmem:[#allocation7] sm:$0xff] %v130
    %139 = vst [vmem:[#allocation7 + $0x8] sm:$0xff] %v135
    // Predicated region
    $region22: #{tpu_custom_call.1} parent=1 // pred_check
      _
    $region23: #{tpu_custom_call.1} parent=1 // pred_check_branch
      %141 = sbr.rel (0) target = $region25
    $region24: #{tpu_custom_call.1} parent=1 // pred_region
      %s143 = ssub.s32 256, 256
      %144 = vsyncadd [#allocation4], %s143
      %s145 = sshll.u32 [#allocation7], 4
      %s146 = int_to_ptr.vmem [resolvable:$true] %s145
      %151 = dma.vmem_to_hbm [thread:$0]  %s146, 256, %s3, [#allocation4], 128, 128, 8
    $region25: #{tpu_custom_call.1} parent=1 // pred_fallthru
      _
    // Predicated region
    $region26: #{tpu_custom_call.1} parent=1 // pred_check
      _
    $region27: #{tpu_custom_call.1} parent=1 // pred_check_branch
      %153 = sbr.rel (0) target = $region29
    $region28: #{tpu_custom_call.1} parent=1 // pred_region
      %154 = dma.done [#allocation4], 256
    $region29: #{tpu_custom_call.1} parent=1 // pred_fallthru
      _
    %155 = vsyncpa [#allocation3], 1
    %156 = vsyncpa [#allocation6], 1
    %157 = vsyncpa [#allocation4], 1

</llo_original>
